<compile_context>
chip_gen: v6e
topology: v6e:2x2x1
jax: 0.10.0
libtpu: 0.0.40
codegen_flags: <defaults>
</compile_context>

<pallas_src>
import functools

import jax
import jax.numpy as jnp
from jax.experimental import pallas as pl
from jax.experimental.pallas import tpu as pltpu


def _argmax_kernel(e_ref, idx_ref):
    """Row-wise argmax over the last (class/lane) axis, stored lane-densely.

    Matches torch.argmax tie-breaking (first occurrence of the maximum).
    e_ref:   (T_TILE, C)     input tile, native dtype
    idx_ref: (1, 1, T_TILE)  int32 output row (time on lanes)
    """
    x = e_ref[...].astype(jnp.float32)               # widen in-register only
    tt, c = x.shape
    maxv = jnp.max(x, axis=-1, keepdims=True)        # (T_TILE, 1)
    lane_ids = jax.lax.broadcasted_iota(jnp.int32, (tt, c), 1)
    # first index attaining the max (ties -> smallest index, like torch)
    cand = jnp.where(x == maxv, lane_ids, jnp.int32(c))
    idx = jnp.min(cand, axis=-1)                     # (T_TILE,) int32
    # NaN guard: a NaN row makes (x == maxv) all-false -> idx == c (out of range);
    # clamp so the host-side labels[i] lookup never indexes out of bounds.
    idx = jnp.minimum(idx, jnp.int32(c - 1))
    idx_ref[...] = idx.astype(jnp.int32)[None, None, :]


def _round_up(x, m):
    return ((x + m - 1) // m) * m


@functools.partial(jax.jit, static_argnames=("t_tile",))
def _greedy_argmax_impl(emission, t_tile):
    t, c = emission.shape
    n_tiles = pl.cdiv(t, t_tile)
    t_pad = n_tiles * t_tile
    if t_pad != t:
        # pad the ragged tail so every block is full; result is sliced back to T
        emission = jnp.pad(emission, ((0, t_pad - t), (0, 0)))
    out = pl.pallas_call(
        _argmax_kernel,
        out_shape=jax.ShapeDtypeStruct((n_tiles, 1, t_tile), jnp.int32),
        grid=(n_tiles,),
        in_specs=[pl.BlockSpec((t_tile, c), lambda i: (i, 0))],
        out_specs=pl.BlockSpec((1, 1, t_tile), lambda i: (i, 0, 0)),
        compiler_params=pltpu.CompilerParams(
            dimension_semantics=("parallel",)),
    )(emission)
    return out.reshape(-1)[:t]


def greedy_argmax(emission: jax.Array, t_tile=None) -> jax.Array:
    """emission (T, C) -> per-frame argmax indices (T,) int32 via a Pallas kernel."""
    t, c = emission.shape
    if t_tile is None:
        itemsize = jnp.dtype(emission.dtype).itemsize
        # Largest lane-aligned row tile keeping the double-buffered input under
        # ~8 MiB (2 x 4 MiB) -> fits every generation's scoped-VMEM default.
        budget_per_buf = 4 * 1024 * 1024
        rows = max(128, (budget_per_buf // max(1, c * itemsize)) // 128 * 128)
        t_tile = min(rows, _round_up(t, 128))
    return _greedy_argmax_impl(emission, int(t_tile))


class GreedyCTCDecoder:
    """JAX/Pallas port of the PyTorch GreedyCTCDecoder module."""

    def __init__(self, labels, ignore):
        self.labels = labels
        self.ignore = jnp.asarray(sorted(int(i) for i in ignore), dtype=jnp.int32)

    def __call__(self, emission: jax.Array) -> str:
        idx = greedy_argmax(emission)                      # (T,) int32, on TPU
        # unique_consecutive + ignore filtering as vectorized device masks; only
        # the data-dependent-length string join runs on host.
        prev = jnp.concatenate([jnp.full((1,), -1, jnp.int32), idx[:-1]])
        keep = idx != prev
        if self.ignore.size:
            keep = keep & jnp.all(idx[:, None] != self.ignore[None, :], axis=-1)
        idx_h, keep_h = jax.device_get((idx, keep))
        # TODO(synk): variable-length string join has no Pallas equivalent (host only).
        return "".join(self.labels[int(i)] for i, k in zip(idx_h, keep_h) if k)


if __name__ == "__main__":
    # Deterministic synthetic inputs: T=8 time steps, C=32 classes (labels).
    T, C = 8, 32
    key = jax.random.PRNGKey(0)
    emission = jax.random.normal(key, (T, C), dtype=jnp.float32)

    labels = ["-"] + [chr(ord("a") + k) for k in range(26)] + ["|", "'", ".", ",", "?"]
    assert len(labels) == C
    ignore = [0]  # blank token index

    decoder = GreedyCTCDecoder(labels, ignore)
    transcript = decoder(emission)

    # Check the Pallas argmax hot path against pure jnp (single-tile path).
    got_idx = jax.block_until_ready(greedy_argmax(emission))
    ref_idx = jnp.argmax(emission, axis=-1).astype(jnp.int32)
    assert bool(jnp.all(ref_idx == got_idx)), (ref_idx, got_idx)

    # Also exercise the tiled / padded multi-block grid path (3 grid steps).
    T2 = 300
    emission2 = jax.random.normal(jax.random.PRNGKey(0), (T2, C), dtype=jnp.bfloat16)
    got_idx2 = jax.block_until_ready(greedy_argmax(emission2, t_tile=128))
    ref_idx2 = jnp.argmax(emission2.astype(jnp.float32), axis=-1).astype(jnp.int32)
    assert bool(jnp.all(ref_idx2 == got_idx2))

    # Check the full decode against a pure-Python reference of the module.
    ref_chars, prev = [], None
    for i in jax.device_get(ref_idx):
        i = int(i)
        if i != prev and i not in set(ignore):
            ref_chars.append(labels[i])
        prev = i
    assert transcript == "".join(ref_chars), (transcript, "".join(ref_chars))
    assert isinstance(transcript, str)

    print("KERNEL_OK")
</pallas_src>

<mosaic_0001>
module attributes {stable_mosaic.version = 11 : i64} {
  func.func @_argmax_kernel(%arg0: i32, %arg1: memref<128x32xf32, #tpu.memory_space<vmem>>, %arg2: memref<1x1x128xi32, #tpu.memory_space<vmem>>) attributes {dimension_semantics = [#tpu.dimension_semantics<parallel>], iteration_bounds = array<i64: 1>, scalar_prefetch = 0 : i64, scratch_operands = 0 : i64, tpu.core_type = #tpu.core_type<tc>, window_params = [{transform_indices = @transform_0, window_bounds = array<i64: 128, 32>}, {transform_indices = @transform_1, window_bounds = array<i64: 1, 1, 128>}]} {
    %c0 = arith.constant 0 : index
    %c0_0 = arith.constant 0 : index
    %0 = vector.load %arg1[%c0, %c0_0] : memref<128x32xf32, #tpu.memory_space<vmem>>, vector<128x32xf32>
    %cst = arith.constant dense<0xFF800000> : vector<128xf32>
    %1 = vector.multi_reduction <maximumf>, %0, %cst [1] : vector<128x32xf32> to vector<128xf32>
    %2 = vector.shape_cast %1 : vector<128xf32> to vector<128x1xf32>
    %3 = tpu.iota {dimensions = array<i32: 1>} : vector<128x32xi32>
    %4 = vector.broadcast %2 : vector<128x1xf32> to vector<128x32xf32>
    %5 = arith.cmpf oeq, %0, %4 : vector<128x32xf32>
    %c32_i32 = arith.constant 32 : i32
    %6 = vector.broadcast %c32_i32 : i32 to vector<128x32xi32>
    %7 = arith.select %5, %3, %6 : vector<128x32xi1>, vector<128x32xi32>
    %cst_1 = arith.constant dense<2147483647> : vector<128xi32>
    %8 = vector.multi_reduction <minsi>, %7, %cst_1 [1] : vector<128x32xi32> to vector<128xi32>
    %c31_i32 = arith.constant 31 : i32
    %9 = vector.broadcast %c31_i32 : i32 to vector<128xi32>
    %10 = arith.minsi %8, %9 : vector<128xi32>
    %11 = vector.shape_cast %10 : vector<128xi32> to vector<1x1x128xi32>
    %c0_2 = arith.constant 0 : index
    %c0_3 = arith.constant 0 : index
    %c0_4 = arith.constant 0 : index
    %12 = vector.load %arg2[%c0_2, %c0_3, %c0_4] : memref<1x1x128xi32, #tpu.memory_space<vmem>>, vector<1x1x128xi32>
    tpu.vector_store %arg2[%c0_2, %c0_3, %c0_4], %11 {strides = array<i32>} : memref<1x1x128xi32, #tpu.memory_space<vmem>>, vector<1x1x128xi32>,
    return
  }
  func.func @transform_0(%arg0: i32) -> (i32, i32) {
    %c0_i32 = arith.constant 0 : i32
    %c0_i32_0 = arith.constant 0 : i32
    return %arg0, %c0_i32 : i32, i32
  }
  func.func @transform_1(%arg0: i32) -> (i32, i32, i32) {
    %c0_i32 = arith.constant 0 : i32
    %c0_i32_0 = arith.constant 0 : i32
    %c0_i32_1 = arith.constant 0 : i32
    return %arg0, %c0_i32, %c0_i32_0 : i32, i32, i32
  }
}

</mosaic_0001>

<llo_original>
// kernel: _greedy_argmax_impl.1
$region0: #{_greedy_argmax_impl.1}
  #allocation0 [shape = 'u32[]', space=smem, size = 0x4, offset = 0x4, fixed_abs, tag = 'smem constant byte address 0x4 - core index']
  #allocation1 [shape = 'u32[144,128]{1,0:T(1,128)}', space=vmem, size = 0x12000, scoped, tag = 'internal scratch']
  %s0 = inlined_call_operand.vmem [shape: f32[128,32], index: 0, kind: input, shape index: {}]
  %s1 = inlined_call_operand.vmem [shape: s32[1,1,128], index: 1, kind: output, shape index: {}]
  %s2 = sld [smem:[#allocation0]]
  $region14: #{_greedy_argmax_impl.1} parent=0
    _
  %s4 = ssub.s32 1, %s2
  %s5 = scalar_select 0, %s4, %s2
  // Predicated region
  $region2: #{_greedy_argmax_impl.1} parent=0 // pred_check
    _
  $region3: #{_greedy_argmax_impl.1} parent=0 // pred_check_branch
    %7 = sbr.rel (0) target = $region5
  $region4: #{_greedy_argmax_impl.1} parent=0 // pred_region
    _
  $region5: #{_greedy_argmax_impl.1} parent=0 // pred_fallthru
    _
  %v8 = vld [vmem:[%s0] sm:$0xff]
  %v9 = vld [vmem:[%s0 + $0x8] sm:$0xff]
  %v10 = vld [vmem:[%s0 + $0x10] sm:$0xff]
  %v11 = vld [vmem:[%s0 + $0x18] sm:$0xff]
  %v12 = vld [vmem:[%s0 + $0x20] sm:$0xff]
  %v13 = vld [vmem:[%s0 + $0x28] sm:$0xff]
  %v14 = vld [vmem:[%s0 + $0x30] sm:$0xff]
  %v15 = vld [vmem:[%s0 + $0x38] sm:$0xff]
  %v16 = vld [vmem:[%s0 + $0x40] sm:$0xff]
  %v17 = vld [vmem:[%s0 + $0x48] sm:$0xff]
  %v18 = vld [vmem:[%s0 + $0x50] sm:$0xff]
  %v19 = vld [vmem:[%s0 + $0x58] sm:$0xff]
  %v20 = vld [vmem:[%s0 + $0x60] sm:$0xff]
  %v21 = vld [vmem:[%s0 + $0x68] sm:$0xff]
  %v22 = vld [vmem:[%s0 + $0x70] sm:$0xff]
  %v23 = vld [vmem:[%s0 + $0x78] sm:$0xff]
  %vm24 = vcmask 261120
  %v25 = vsel %vm24, %v8, -inf
  %26 = vmax.xlane.f32.xlu0 %v25
  %v27 = vpop.xlane.xlu0 %26
  %v28 = vsel %vm24, %v9, -inf
  %29 = vmax.xlane.f32.xlu0 %v28
  %v30 = vpop.xlane.xlu0 %29
  %v31 = vsel %vm24, %v10, -inf
  %32 = vmax.xlane.f32.xlu0 %v31
  %v33 = vpop.xlane.xlu0 %32
  %v34 = vsel %vm24, %v11, -inf
  %35 = vmax.xlane.f32.xlu0 %v34
  %v36 = vpop.xlane.xlu0 %35
  %v37 = vsel %vm24, %v12, -inf
  %38 = vmax.xlane.f32.xlu0 %v37
  %v39 = vpop.xlane.xlu0 %38
  %v40 = vsel %vm24, %v13, -inf
  %41 = vmax.xlane.f32.xlu0 %v40
  %v42 = vpop.xlane.xlu0 %41
  %v43 = vsel %vm24, %v14, -inf
  %44 = vmax.xlane.f32.xlu0 %v43
  %v45 = vpop.xlane.xlu0 %44
  %v46 = vsel %vm24, %v15, -inf
  %47 = vmax.xlane.f32.xlu0 %v46
  %v48 = vpop.xlane.xlu0 %47
  %v49 = vsel %vm24, %v16, -inf
  %50 = vmax.xlane.f32.xlu0 %v49
  %v51 = vpop.xlane.xlu0 %50
  %v52 = vsel %vm24, %v17, -inf
  %53 = vmax.xlane.f32.xlu0 %v52
  %v54 = vpop.xlane.xlu0 %53
  %v55 = vsel %vm24, %v18, -inf
  %56 = vmax.xlane.f32.xlu0 %v55
  %v57 = vpop.xlane.xlu0 %56
  %v58 = vsel %vm24, %v19, -inf
  %59 = vmax.xlane.f32.xlu0 %v58
  %v60 = vpop.xlane.xlu0 %59
  %v61 = vsel %vm24, %v20, -inf
  %62 = vmax.xlane.f32.xlu0 %v61
  %v63 = vpop.xlane.xlu0 %62
  %v64 = vsel %vm24, %v21, -inf
  %65 = vmax.xlane.f32.xlu0 %v64
  %v66 = vpop.xlane.xlu0 %65
  %v67 = vsel %vm24, %v22, -inf
  %68 = vmax.xlane.f32.xlu0 %v67
  %v69 = vpop.xlane.xlu0 %68
  %v70 = vsel %vm24, %v23, -inf
  %71 = vmax.xlane.f32.xlu0 %v70
  %v72 = vpop.xlane.xlu0 %71
  %v73 = vlaneseq
  %v74 = vand.u32 %v73, 127
  %vm75 = vcmp.eq.f32.partialorder %v8, %v27
  %vm76 = vcmp.eq.f32.partialorder %v9, %v30
  %vm77 = vcmp.eq.f32.partialorder %v10, %v33
  %vm78 = vcmp.eq.f32.partialorder %v11, %v36
  %vm79 = vcmp.eq.f32.partialorder %v12, %v39
  %vm80 = vcmp.eq.f32.partialorder %v13, %v42
  %vm81 = vcmp.eq.f32.partialorder %v14, %v45
  %vm82 = vcmp.eq.f32.partialorder %v15, %v48
  %vm83 = vcmp.eq.f32.partialorder %v16, %v51
  %vm84 = vcmp.eq.f32.partialorder %v17, %v54
  %vm85 = vcmp.eq.f32.partialorder %v18, %v57
  %vm86 = vcmp.eq.f32.partialorder %v19, %v60
  %vm87 = vcmp.eq.f32.partialorder %v20, %v63
  %vm88 = vcmp.eq.f32.partialorder %v21, %v66
  %vm89 = vcmp.eq.f32.partialorder %v22, %v69
  %vm90 = vcmp.eq.f32.partialorder %v23, %v72
  %v91 = vsel %vm75, %v74, 32
  %v92 = vsel %vm76, %v74, 32
  %v93 = vsel %vm77, %v74, 32
  %v94 = vsel %vm78, %v74, 32
  %v95 = vsel %vm79, %v74, 32
  %v96 = vsel %vm80, %v74, 32
  %v97 = vsel %vm81, %v74, 32
  %v98 = vsel %vm82, %v74, 32
  %v99 = vsel %vm83, %v74, 32
  %v100 = vsel %vm84, %v74, 32
  %v101 = vsel %vm85, %v74, 32
  %v102 = vsel %vm86, %v74, 32
  %v103 = vsel %vm87, %v74, 32
  %v104 = vsel %vm88, %v74, 32
  %v105 = vsel %vm89, %v74, 32
  %v106 = vsel %vm90, %v74, 32
  %v107 = vsel %vm24, %v91, 2147483647
  %v108 = vand.u32 %v107, 65535
  %v109 = vshra.s32 %v107, 16
  %v110 = vcvt.s32.f32 %v108
  %v111 = vcvt.s32.f32 %v109
  %112 = vmin.xlane.f32.xlu0 %v111
  %v113 = vpop.xlane.xlu0 %112
  %vm114 = vcmp.eq.f32.partialorder %v111, %v113
  %v115 = vsel %vm114, %v110, inf
  %116 = vmin.xlane.f32.xlu0 %v115
  %v117 = vpop.xlane.xlu0 %116
  %v118 = vcvt.f32.s32 %v117
  %v119 = vcvt.f32.s32 %v113
  %v120 = vshll.u32 %v119, 16
  %v121 = vadd.s32 %v120, %v118
  %v122 = vsel %vm24, %v92, 2147483647
  %v123 = vand.u32 %v122, 65535
  %v124 = vshra.s32 %v122, 16
  %v125 = vcvt.s32.f32 %v123
  %v126 = vcvt.s32.f32 %v124
  %127 = vmin.xlane.f32.xlu0 %v126
  %v128 = vpop.xlane.xlu0 %127
  %vm129 = vcmp.eq.f32.partialorder %v126, %v128
  %v130 = vsel %vm129, %v125, inf
  %131 = vmin.xlane.f32.xlu0 %v130
  %v132 = vpop.xlane.xlu0 %131
  %v133 = vcvt.f32.s32 %v132
  %v134 = vcvt.f32.s32 %v128
  %v135 = vshll.u32 %v134, 16
  %v136 = vadd.s32 %v135, %v133
  %v137 = vsel %vm24, %v93, 2147483647
  %v138 = vand.u32 %v137, 65535
  %v139 = vshra.s32 %v137, 16
  %v140 = vcvt.s32.f32 %v138
  %v141 = vcvt.s32.f32 %v139
  %142 = vmin.xlane.f32.xlu0 %v141
  %v143 = vpop.xlane.xlu0 %142
  %vm144 = vcmp.eq.f32.partialorder %v141, %v143
  %v145 = vsel %vm144, %v140, inf
  %146 = vmin.xlane.f32.xlu0 %v145
  %v147 = vpop.xlane.xlu0 %146
  %v148 = vcvt.f32.s32 %v147
  %v149 = vcvt.f32.s32 %v143
  %v150 = vshll.u32 %v149, 16
  %v151 = vadd.s32 %v150, %v148
  %v152 = vsel %vm24, %v94, 2147483647
  %v153 = vand.u32 %v152, 65535
  %v154 = vshra.s32 %v152, 16
  %v155 = vcvt.s32.f32 %v153
  %v156 = vcvt.s32.f32 %v154
  %157 = vmin.xlane.f32.xlu0 %v156
  %v158 = vpop.xlane.xlu0 %157
  %vm159 = vcmp.eq.f32.partialorder %v156, %v158
  %v160 = vsel %vm159, %v155, inf
  %161 = vmin.xlane.f32.xlu0 %v160
  %v162 = vpop.xlane.xlu0 %161
  %v163 = vcvt.f32.s32 %v162
  %v164 = vcvt.f32.s32 %v158
  %v165 = vshll.u32 %v164, 16
  %v166 = vadd.s32 %v165, %v163
  %v167 = vsel %vm24, %v95, 2147483647
  %v168 = vand.u32 %v167, 65535
  %v169 = vshra.s32 %v167, 16
  %v170 = vcvt.s32.f32 %v168
  %v171 = vcvt.s32.f32 %v169
  %172 = vmin.xlane.f32.xlu0 %v171
  %v173 = vpop.xlane.xlu0 %172
  %vm174 = vcmp.eq.f32.partialorder %v171, %v173
  %v175 = vsel %vm174, %v170, inf
  %176 = vmin.xlane.f32.xlu0 %v175
  %v177 = vpop.xlane.xlu0 %176
  %v178 = vcvt.f32.s32 %v177
  %v179 = vcvt.f32.s32 %v173
  %v180 = vshll.u32 %v179, 16
  %v181 = vadd.s32 %v180, %v178
  %v182 = vsel %vm24, %v96, 2147483647
  %v183 = vand.u32 %v182, 65535
  %v184 = vshra.s32 %v182, 16
  %v185 = vcvt.s32.f32 %v183
  %v186 = vcvt.s32.f32 %v184
  %187 = vmin.xlane.f32.xlu0 %v186
  %v188 = vpop.xlane.xlu0 %187
  %vm189 = vcmp.eq.f32.partialorder %v186, %v188
  %v190 = vsel %vm189, %v185, inf
  %191 = vmin.xlane.f32.xlu0 %v190
  %v192 = vpop.xlane.xlu0 %191
  %v193 = vcvt.f32.s32 %v192
  %v194 = vcvt.f32.s32 %v188
  %v195 = vshll.u32 %v194, 16
  %v196 = vadd.s32 %v195, %v193
  %v197 = vsel %vm24, %v97, 2147483647
  %v198 = vand.u32 %v197, 65535
  %v199 = vshra.s32 %v197, 16
  %v200 = vcvt.s32.f32 %v198
  %v201 = vcvt.s32.f32 %v199
  %202 = vmin.xlane.f32.xlu0 %v201
  %v203 = vpop.xlane.xlu0 %202
  %vm204 = vcmp.eq.f32.partialorder %v201, %v203
  %v205 = vsel %vm204, %v200, inf
  %206 = vmin.xlane.f32.xlu0 %v205
  %v207 = vpop.xlane.xlu0 %206
  %v208 = vcvt.f32.s32 %v207
  %v209 = vcvt.f32.s32 %v203
  %v210 = vshll.u32 %v209, 16
  %v211 = vadd.s32 %v210, %v208
  %v212 = vsel %vm24, %v98, 2147483647
  %v213 = vand.u32 %v212, 65535
  %v214 = vshra.s32 %v212, 16
  %v215 = vcvt.s32.f32 %v213
  %v216 = vcvt.s32.f32 %v214
  %217 = vmin.xlane.f32.xlu0 %v216
  %v218 = vpop.xlane.xlu0 %217
  %vm219 = vcmp.eq.f32.partialorder %v216, %v218
  %v220 = vsel %vm219, %v215, inf
  %221 = vmin.xlane.f32.xlu0 %v220
  %v222 = vpop.xlane.xlu0 %221
  %v223 = vcvt.f32.s32 %v222
  %v224 = vcvt.f32.s32 %v218
  %v225 = vshll.u32 %v224, 16
  %v226 = vadd.s32 %v225, %v223
  %v227 = vsel %vm24, %v99, 2147483647
  %v228 = vand.u32 %v227, 65535
  %v229 = vshra.s32 %v227, 16
  %v230 = vcvt.s32.f32 %v228
  %v231 = vcvt.s32.f32 %v229
  %232 = vmin.xlane.f32.xlu0 %v231
  %v233 = vpop.xlane.xlu0 %232
  %vm234 = vcmp.eq.f32.partialorder %v231, %v233
  %v235 = vsel %vm234, %v230, inf
  %236 = vmin.xlane.f32.xlu0 %v235
  %v237 = vpop.xlane.xlu0 %236
  %v238 = vcvt.f32.s32 %v237
  %v239 = vcvt.f32.s32 %v233
  %v240 = vshll.u32 %v239, 16
  %v241 = vadd.s32 %v240, %v238
  %v242 = vsel %vm24, %v100, 2147483647
  %v243 = vand.u32 %v242, 65535
  %v244 = vshra.s32 %v242, 16
  %v245 = vcvt.s32.f32 %v243
  %v246 = vcvt.s32.f32 %v244
  %247 = vmin.xlane.f32.xlu0 %v246
  %v248 = vpop.xlane.xlu0 %247
  %vm249 = vcmp.eq.f32.partialorder %v246, %v248
  %v250 = vsel %vm249, %v245, inf
  %251 = vmin.xlane.f32.xlu0 %v250
  %v252 = vpop.xlane.xlu0 %251
  %v253 = vcvt.f32.s32 %v252
  %v254 = vcvt.f32.s32 %v248
  %v255 = vshll.u32 %v254, 16
  %v256 = vadd.s32 %v255, %v253
  %v257 = vsel %vm24, %v101, 2147483647
  %v258 = vand.u32 %v257, 65535
  %v259 = vshra.s32 %v257, 16
  %v260 = vcvt.s32.f32 %v258
  %v261 = vcvt.s32.f32 %v259
  %262 = vmin.xlane.f32.xlu0 %v261
  %v263 = vpop.xlane.xlu0 %262
  %vm264 = vcmp.eq.f32.partialorder %v261, %v263
  %v265 = vsel %vm264, %v260, inf
  %266 = vmin.xlane.f32.xlu0 %v265
  %v267 = vpop.xlane.xlu0 %266
  %v268 = vcvt.f32.s32 %v267
  %v269 = vcvt.f32.s32 %v263
  %v270 = vshll.u32 %v269, 16
  %v271 = vadd.s32 %v270, %v268
  %v272 = vsel %vm24, %v102, 2147483647
  %v273 = vand.u32 %v272, 65535
  %v274 = vshra.s32 %v272, 16
  %v275 = vcvt.s32.f32 %v273
  %v276 = vcvt.s32.f32 %v274
  %277 = vmin.xlane.f32.xlu0 %v276
  %v278 = vpop.xlane.xlu0 %277
  %vm279 = vcmp.eq.f32.partialorder %v276, %v278
  %v280 = vsel %vm279, %v275, inf
  %281 = vmin.xlane.f32.xlu0 %v280
  %v282 = vpop.xlane.xlu0 %281
  %v283 = vcvt.f32.s32 %v282
  %v284 = vcvt.f32.s32 %v278
  %v285 = vshll.u32 %v284, 16
  %v286 = vadd.s32 %v285, %v283
  %v287 = vsel %vm24, %v103, 2147483647
  %v288 = vand.u32 %v287, 65535
  %v289 = vshra.s32 %v287, 16
  %v290 = vcvt.s32.f32 %v288
  %v291 = vcvt.s32.f32 %v289
  %292 = vmin.xlane.f32.xlu0 %v291
  %v293 = vpop.xlane.xlu0 %292
  %vm294 = vcmp.eq.f32.partialorder %v291, %v293
  %v295 = vsel %vm294, %v290, inf
  %296 = vmin.xlane.f32.xlu0 %v295
  %v297 = vpop.xlane.xlu0 %296
  %v298 = vcvt.f32.s32 %v297
  %v299 = vcvt.f32.s32 %v293
  %v300 = vshll.u32 %v299, 16
  %v301 = vadd.s32 %v300, %v298
  %v302 = vsel %vm24, %v104, 2147483647
  %v303 = vand.u32 %v302, 65535
  %v304 = vshra.s32 %v302, 16
  %v305 = vcvt.s32.f32 %v303
  %v306 = vcvt.s32.f32 %v304
  %307 = vmin.xlane.f32.xlu0 %v306
  %v308 = vpop.xlane.xlu0 %307
  %vm309 = vcmp.eq.f32.partialorder %v306, %v308
  %v310 = vsel %vm309, %v305, inf
  %311 = vmin.xlane.f32.xlu0 %v310
  %v312 = vpop.xlane.xlu0 %311
  %v313 = vcvt.f32.s32 %v312
  %v314 = vcvt.f32.s32 %v308
  %v315 = vshll.u32 %v314, 16
  %v316 = vadd.s32 %v315, %v313
  %v317 = vsel %vm24, %v105, 2147483647
  %v318 = vand.u32 %v317, 65535
  %v319 = vshra.s32 %v317, 16
  %v320 = vcvt.s32.f32 %v318
  %v321 = vcvt.s32.f32 %v319
  %322 = vmin.xlane.f32.xlu0 %v321
  %v323 = vpop.xlane.xlu0 %322
  %vm324 = vcmp.eq.f32.partialorder %v321, %v323
  %v325 = vsel %vm324, %v320, inf
  %326 = vmin.xlane.f32.xlu0 %v325
  %v327 = vpop.xlane.xlu0 %326
  %v328 = vcvt.f32.s32 %v327
  %v329 = vcvt.f32.s32 %v323
  %v330 = vshll.u32 %v329, 16
  %v331 = vadd.s32 %v330, %v328
  %v332 = vsel %vm24, %v106, 2147483647
  %v333 = vand.u32 %v332, 65535
  %v334 = vshra.s32 %v332, 16
  %v335 = vcvt.s32.f32 %v333
  %v336 = vcvt.s32.f32 %v334
  %337 = vmin.xlane.f32.xlu0 %v336
  %v338 = vpop.xlane.xlu0 %337
  %vm339 = vcmp.eq.f32.partialorder %v336, %v338
  %v340 = vsel %vm339, %v335, inf
  %341 = vmin.xlane.f32.xlu0 %v340
  %v342 = vpop.xlane.xlu0 %341
  %v343 = vcvt.f32.s32 %v342
  %v344 = vcvt.f32.s32 %v338
  %v345 = vshll.u32 %v344, 16
  %v346 = vadd.s32 %v345, %v343
  %vm347 = vcmp.lt.s32.totalorder %v121, 31
  %v348 = vsel %vm347, %v121, 31
  %vm349 = vcmp.lt.s32.totalorder %v136, 31
  %v350 = vsel %vm349, %v136, 31
  %vm351 = vcmp.lt.s32.totalorder %v151, 31
  %v352 = vsel %vm351, %v151, 31
  %vm353 = vcmp.lt.s32.totalorder %v166, 31
  %v354 = vsel %vm353, %v166, 31
  %vm355 = vcmp.lt.s32.totalorder %v181, 31
  %v356 = vsel %vm355, %v181, 31
  %vm357 = vcmp.lt.s32.totalorder %v196, 31
  %v358 = vsel %vm357, %v196, 31
  %vm359 = vcmp.lt.s32.totalorder %v211, 31
  %v360 = vsel %vm359, %v211, 31
  %vm361 = vcmp.lt.s32.totalorder %v226, 31
  %v362 = vsel %vm361, %v226, 31
  %vm363 = vcmp.lt.s32.totalorder %v241, 31
  %v364 = vsel %vm363, %v241, 31
  %vm365 = vcmp.lt.s32.totalorder %v256, 31
  %v366 = vsel %vm365, %v256, 31
  %vm367 = vcmp.lt.s32.totalorder %v271, 31
  %v368 = vsel %vm367, %v271, 31
  %vm369 = vcmp.lt.s32.totalorder %v286, 31
  %v370 = vsel %vm369, %v286, 31
  %vm371 = vcmp.lt.s32.totalorder %v301, 31
  %v372 = vsel %vm371, %v301, 31
  %vm373 = vcmp.lt.s32.totalorder %v316, 31
  %v374 = vsel %vm373, %v316, 31
  %vm375 = vcmp.lt.s32.totalorder %v331, 31
  %v376 = vsel %vm375, %v331, 31
  %vm377 = vcmp.lt.s32.totalorder %v346, 31
  %v378 = vsel %vm377, %v346, 31
  %v379 = vlaneseq
  %v380 = vshrl.u32 %v379, 7
  %v381 = vsub.s32 %v74, %v380
  %v382 = vrot.slane %v348, %v381
  %v383 = vadd.s32 %v74, 4294967288
  %v384 = vlaneseq
  %v385 = vshrl.u32 %v384, 7
  %v386 = vsub.s32 %v383, %v385
  %v387 = vrot.slane %v350, %v386
  %vm388 = vcmask 130112
  %v389 = vsel %vm388, %v387, %v382
  %v390 = vadd.s32 %v74, 4294967280
  %v391 = vlaneseq
  %v392 = vshrl.u32 %v391, 7
  %v393 = vsub.s32 %v390, %v392
  %v394 = vrot.slane %v352, %v393
  %vm395 = vcmask 195712
  %v396 = vsel %vm395, %v394, %v389
  %v397 = vadd.s32 %v74, 4294967272
  %v398 = vlaneseq
  %v399 = vshrl.u32 %v398, 7
  %v400 = vsub.s32 %v397, %v399
  %v401 = vrot.slane %v354, %v400
  %vm402 = vcmask 261312
  %v403 = vsel %vm402, %v401, %v396
  %v404 = vadd.s32 %v74, 4294967264
  %v405 = vlaneseq
  %v406 = vshrl.u32 %v405, 7
  %v407 = vsub.s32 %v404, %v406
  %v408 = vrot.slane %v356, %v407
  %vm409 = vcmask 326912
  %v410 = vsel %vm409, %v408, %v403
  %v411 = vadd.s32 %v74, 4294967256
  %v412 = vlaneseq
  %v413 = vshrl.u32 %v412, 7
  %v414 = vsub.s32 %v411, %v413
  %v415 = vrot.slane %v358, %v414
  %vm416 = vcmask 392512
  %v417 = vsel %vm416, %v415, %v410
  %v418 = vadd.s32 %v74, 4294967248
  %v419 = vlaneseq
  %v420 = vshrl.u32 %v419, 7
  %v421 = vsub.s32 %v418, %v420
  %v422 = vrot.slane %v360, %v421
  %vm423 = vcmask 458112
  %v424 = vsel %vm423, %v422, %v417
  %v425 = vadd.s32 %v74, 4294967240
  %v426 = vlaneseq
  %v427 = vshrl.u32 %v426, 7
  %v428 = vsub.s32 %v425, %v427
  %v429 = vrot.slane %v362, %v428
  %vm430 = vcmask 523712
  %v431 = vsel %vm430, %v429, %v424
  %v432 = vadd.s32 %v74, 4294967232
  %v433 = vlaneseq
  %v434 = vshrl.u32 %v433, 7
  %v435 = vsub.s32 %v432, %v434
  %v436 = vrot.slane %v364, %v435
  %vm437 = vcmask 589312
  %v438 = vsel %vm437, %v436, %v431
  %v439 = vadd.s32 %v74, 4294967224
  %v440 = vlaneseq
  %v441 = vshrl.u32 %v440, 7
  %v442 = vsub.s32 %v439, %v441
  %v443 = vrot.slane %v366, %v442
  %vm444 = vcmask 654912
  %v445 = vsel %vm444, %v443, %v438
  %v446 = vadd.s32 %v74, 4294967216
  %v447 = vlaneseq
  %v448 = vshrl.u32 %v447, 7
  %v449 = vsub.s32 %v446, %v448
  %v450 = vrot.slane %v368, %v449
  %vm451 = vcmask 720512
  %v452 = vsel %vm451, %v450, %v445
  %v453 = vadd.s32 %v74, 4294967208
  %v454 = vlaneseq
  %v455 = vshrl.u32 %v454, 7
  %v456 = vsub.s32 %v453, %v455
  %v457 = vrot.slane %v370, %v456
  %vm458 = vcmask 786112
  %v459 = vsel %vm458, %v457, %v452
  %v460 = vadd.s32 %v74, 4294967200
  %v461 = vlaneseq
  %v462 = vshrl.u32 %v461, 7
  %v463 = vsub.s32 %v460, %v462
  %v464 = vrot.slane %v372, %v463
  %vm465 = vcmask 851712
  %v466 = vsel %vm465, %v464, %v459
  %v467 = vadd.s32 %v74, 4294967192
  %v468 = vlaneseq
  %v469 = vshrl.u32 %v468, 7
  %v470 = vsub.s32 %v467, %v469
  %v471 = vrot.slane %v374, %v470
  %vm472 = vcmask 917312
  %v473 = vsel %vm472, %v471, %v466
  %v474 = vadd.s32 %v74, 4294967184
  %v475 = vlaneseq
  %v476 = vshrl.u32 %v475, 7
  %v477 = vsub.s32 %v474, %v476
  %v478 = vrot.slane %v376, %v477
  %vm479 = vcmask 982912
  %v480 = vsel %vm479, %v478, %v473
  %v481 = vadd.s32 %v74, 4294967176
  %v482 = vlaneseq
  %v483 = vshrl.u32 %v482, 7
  %v484 = vsub.s32 %v481, %v483
  %v485 = vrot.slane %v378, %v484
  %vm486 = vcmask 1048512
  %v487 = vsel %vm486, %v485, %v480
  %488 = vst [vmem:[%s1] sm:$0x1] %v487
  // Predicated region
  $region6: #{_greedy_argmax_impl.1} parent=0 // pred_check
    _
  $region7: #{_greedy_argmax_impl.1} parent=0 // pred_check_branch
    %490 = sbr.rel (0) target = $region9
  $region8: #{_greedy_argmax_impl.1} parent=0 // pred_region
    _
  $region9: #{_greedy_argmax_impl.1} parent=0 // pred_fallthru
    _
  // Predicated region
  $region10: #{_greedy_argmax_impl.1} parent=0 // pred_check
    _
  $region11: #{_greedy_argmax_impl.1} parent=0 // pred_check_branch
    %492 = sbr.rel (0) target = $region13
  $region12: #{_greedy_argmax_impl.1} parent=0 // pred_region
    _
  $region13: #{_greedy_argmax_impl.1} parent=0 // pred_fallthru
    _

</llo_original>
